<compile_context>
chip_gen: v7x
topology: tpu7x:2x2x1
jax: 0.10.0
libtpu: 0.0.40
codegen_flags: <defaults>
</compile_context>

<pallas_src>
import jax
import jax.numpy as jnp
from jax.experimental import pallas as pl
from jax.experimental.pallas import tpu as pltpu


def _round_up(v, m):
    return (v + m - 1) // m * m


def _cdiv(a, b):
    return -(-a // b)


def _vmem_capacity_bytes():
    try:
        cap = getattr(pltpu.get_tpu_info(), "vmem_capacity_bytes", None)
        if cap:
            return int(cap)
    except Exception:
        pass
    return 64 << 20  # conservative fallback: v7x per-TensorCore VMEM


def sae_kernel(x_ref, w1_ref, b1_ref, w2_ref, b2_ref,
               w3_ref, b3_ref, w4_ref, b4_ref, o_ref):
    # One (TILE_B, n_movies) batch tile per grid step. All four Linear layers
    # fused: hidden dims (20, 10) are tiny, intermediates never leave vregs.
    # x arrives as f32 (no wrapper cast copy); cast MXU operands to bf16 only.
    x = x_ref[...].astype(jnp.bfloat16)                         # (TILE_B, N)

    h = jnp.dot(x, w1_ref[...], preferred_element_type=jnp.float32) + b1_ref[...]
    h = jax.nn.sigmoid(h).astype(jnp.bfloat16)                  # (TILE_B, 20)

    h = jnp.dot(h, w2_ref[...], preferred_element_type=jnp.float32) + b2_ref[...]
    h = jax.nn.sigmoid(h).astype(jnp.bfloat16)                  # (TILE_B, 10)

    h = jnp.dot(h, w3_ref[...], preferred_element_type=jnp.float32) + b3_ref[...]
    h = jax.nn.sigmoid(h).astype(jnp.bfloat16)                  # (TILE_B, 20)

    out = jnp.dot(h, w4_ref[...], preferred_element_type=jnp.float32) + b4_ref[...]
    o_ref[...] = out.astype(o_ref.dtype)                        # bf16 store


def prepare_params(params):
    """One-time (hoisted out of the forward path) weight preparation:
    bf16 matmul operands, f32 biases reshaped to (1, d) for broadcasting."""
    bf16 = jnp.bfloat16
    f32 = jnp.float32
    return {
        "w1": params["w1"].astype(bf16), "b1": params["b1"].reshape(1, -1).astype(f32),
        "w2": params["w2"].astype(bf16), "b2": params["b2"].reshape(1, -1).astype(f32),
        "w3": params["w3"].astype(bf16), "b3": params["b3"].reshape(1, -1).astype(f32),
        "w4": params["w4"].astype(bf16), "b4": params["b4"].reshape(1, -1).astype(f32),
    }


def _choose_tile_and_vmem(B, nm, out_bytes):
    """Pick a batch tile that (a) fits in a VMEM budget (double-buffered x/out
    plus resident weights), (b) is as large as possible to amortize per-step
    overhead, (c) is a multiple of 16, (d) yields >=2 grid steps when B allows
    (v7x megacore), (e) keeps tail-tile waste small."""
    cap = _vmem_capacity_bytes()
    budget = int(cap * 0.75)

    # Resident (constant index_map) weights + biases; count 2x for buffering.
    weight_elems = nm * 20 + 20 * 10 + 10 * 20 + 20 * nm
    bias_elems = 20 + 10 + 20 + nm
    resident = 2 * (2 * weight_elems + 4 * bias_elems)
    # Per batch-row VMEM: double-buffered f32 x tile + double-buffered out tile.
    per_row = nm * (2 * 4 + 2 * out_bytes)

    cap_rows = max(16, (budget - resident) // max(per_row, 1))
    tile_cap = max(16, (min(int(cap_rows), 2048) // 16) * 16)

    g = _cdiv(B, tile_cap)
    if g == 1 and B >= 32:
        g = 2                                  # give both v7x TensorCores work
    tile_b = min(tile_cap, _round_up(_cdiv(B, g), 16))
    tile_b = min(tile_b, _round_up(B, 16))

    footprint = tile_b * per_row + resident
    vmem_limit = int(min(cap - (8 << 20), max(32 << 20, footprint + (4 << 20))))
    return tile_b, vmem_limit


def sae_forward(x, prepped, *, out_dtype=jnp.bfloat16):
    """x: (B, n_movies) float32. prepped: output of prepare_params()."""
    B, nm = x.shape
    out_bytes = jnp.dtype(out_dtype).itemsize
    tile_b, vmem_limit = _choose_tile_and_vmem(B, nm, out_bytes)
    grid_b = _cdiv(B, tile_b)

    # Weights/biases: constant index_map -> VMEM-resident across all steps.
    def resident(shape):
        return pl.BlockSpec(shape, lambda i: (0,) * len(shape))

    weight_elems = nm * 20 + 20 * 10 + 10 * 20 + 20 * nm
    flops = 2 * B * weight_elems
    transcendentals = B * (20 + 10 + 20)
    bytes_accessed = (
        B * nm * 4                 # x (f32 read, cast in-kernel)
        + B * nm * out_bytes       # out
        + 2 * weight_elems         # bf16 weights
        + 4 * (20 + 10 + 20 + nm)  # f32 biases
    )

    return pl.pallas_call(
        sae_kernel,
        out_shape=jax.ShapeDtypeStruct((B, nm), out_dtype),
        grid=(grid_b,),
        in_specs=[
            pl.BlockSpec((tile_b, nm), lambda i: (i, 0)),   # x: one batch tile / step
            resident(prepped["w1"].shape), resident(prepped["b1"].shape),
            resident(prepped["w2"].shape), resident(prepped["b2"].shape),
            resident(prepped["w3"].shape), resident(prepped["b3"].shape),
            resident(prepped["w4"].shape), resident(prepped["b4"].shape),
        ],
        out_specs=pl.BlockSpec((tile_b, nm), lambda i: (i, 0)),
        compiler_params=pltpu.CompilerParams(
            dimension_semantics=("parallel",),
            vmem_limit_bytes=vmem_limit),
        cost_estimate=pl.CostEstimate(
            flops=flops,
            transcendentals=transcendentals,
            bytes_accessed=bytes_accessed),
    )(x, prepped["w1"], prepped["b1"], prepped["w2"], prepped["b2"],
      prepped["w3"], prepped["b3"], prepped["w4"], prepped["b4"])


def init_params(key, n_movies):
    """torch.nn.Linear-style init, weights stored as (in_features, out_features)."""
    dims = [(n_movies, 20), (20, 10), (10, 20), (20, n_movies)]
    params = {}
    for idx, (fan_in, fan_out) in enumerate(dims, start=1):
        key, kw, kb = jax.random.split(key, 3)
        bound = 1.0 / jnp.sqrt(jnp.float32(fan_in))
        params[f"w{idx}"] = jax.random.uniform(
            kw, (fan_in, fan_out), jnp.float32, -bound, bound)
        params[f"b{idx}"] = jax.random.uniform(
            kb, (fan_out,), jnp.float32, -bound, bound)
    return params


def sae_reference_f32(x, params):
    """Pure-f32 JAX reference (PyTorch-equivalent forward)."""
    h = jax.nn.sigmoid(x @ params["w1"] + params["b1"])
    h = jax.nn.sigmoid(h @ params["w2"] + params["b2"])
    h = jax.nn.sigmoid(h @ params["w3"] + params["b3"])
    return h @ params["w4"] + params["b4"]


def sae_reference_bf16(x, params):
    """Reference with the same bf16-operand / f32-accumulate policy as the kernel."""
    def mm(a, w):
        return jnp.dot(a.astype(jnp.bfloat16), w.astype(jnp.bfloat16),
                       preferred_element_type=jnp.float32)
    h = jax.nn.sigmoid(mm(x, params["w1"]) + params["b1"])
    h = jax.nn.sigmoid(mm(h, params["w2"]) + params["b2"])
    h = jax.nn.sigmoid(mm(h, params["w3"]) + params["b3"])
    return mm(h, params["w4"]) + params["b4"]


def _check(x, params, prepped, label):
    out = jax.block_until_ready(sae_forward(x, prepped))
    assert out.shape == x.shape, label
    assert out.dtype == jnp.bfloat16, label
    out_f32 = out.astype(jnp.float32)

    # Exact-policy check: same bf16 MXU operands + f32 accumulate + bf16 output.
    ref_bf16 = sae_reference_bf16(x, params).astype(jnp.bfloat16).astype(jnp.float32)
    assert jnp.allclose(out_f32, ref_bf16, atol=2e-2, rtol=2e-2), \
        f"{label}: mismatch vs bf16-matched JAX reference"

    # Loose sanity check against the full-f32 PyTorch-equivalent forward.
    ref_f32 = sae_reference_f32(x, params)
    assert jnp.allclose(out_f32, ref_f32, atol=1e-1, rtol=1e-1), \
        f"{label}: mismatch vs f32 JAX reference"


if __name__ == "__main__":
    # Deliberately non-aligned shapes to exercise the ragged-edge paths:
    # batch not a multiple of 16, n_movies not a multiple of 128.
    n_movies = 200

    key = jax.random.PRNGKey(0)
    key, kx1, kx2 = jax.random.split(key, 3)
    params = init_params(key, n_movies)
    prepped = prepare_params(params)   # hoisted: done once, not per forward

    # Small single-tile case (B=10 -> one partial 16-row tile).
    x_small = jax.random.uniform(kx1, (10, n_movies), jnp.float32, 0.0, 5.0)
    _check(x_small, params, prepped, "small")

    # Multi-tile case (B=100 -> 2 grid steps, masked tail rows).
    x_big = jax.random.uniform(kx2, (100, n_movies), jnp.float32, 0.0, 5.0)
    _check(x_big, params, prepped, "multi-tile")

    print("KERNEL_OK")
</pallas_src>

<mosaic_0001>
module attributes {stable_mosaic.version = 11 : i64} {
  func.func @sae_kernel(%arg0: i32, %arg1: memref<16x200xf32, #tpu.memory_space<vmem>>, %arg2: memref<200x20xbf16, #tpu.memory_space<vmem>>, %arg3: memref<1x20xf32, #tpu.memory_space<vmem>>, %arg4: memref<20x10xbf16, #tpu.memory_space<vmem>>, %arg5: memref<1x10xf32, #tpu.memory_space<vmem>>, %arg6: memref<10x20xbf16, #tpu.memory_space<vmem>>, %arg7: memref<1x20xf32, #tpu.memory_space<vmem>>, %arg8: memref<20x200xbf16, #tpu.memory_space<vmem>>, %arg9: memref<1x200xf32, #tpu.memory_space<vmem>>, %arg10: memref<16x200xbf16, #tpu.memory_space<vmem>>) attributes {dimension_semantics = [#tpu.dimension_semantics<parallel>], iteration_bounds = array<i64: 1>, scalar_prefetch = 0 : i64, scratch_operands = 0 : i64, tpu.core_type = #tpu.core_type<tc>, window_params = [{transform_indices = @transform_0, window_bounds = array<i64: 16, 200>}, {pipeline_mode = #tpu.pipeline_mode<synchronous>, transform_indices = @transform_1, window_bounds = array<i64: 200, 20>}, {pipeline_mode = #tpu.pipeline_mode<synchronous>, transform_indices = @transform_2, window_bounds = array<i64: 1, 20>}, {pipeline_mode = #tpu.pipeline_mode<synchronous>, transform_indices = @transform_3, window_bounds = array<i64: 20, 10>}, {pipeline_mode = #tpu.pipeline_mode<synchronous>, transform_indices = @transform_4, window_bounds = array<i64: 1, 10>}, {pipeline_mode = #tpu.pipeline_mode<synchronous>, transform_indices = @transform_5, window_bounds = array<i64: 10, 20>}, {pipeline_mode = #tpu.pipeline_mode<synchronous>, transform_indices = @transform_6, window_bounds = array<i64: 1, 20>}, {pipeline_mode = #tpu.pipeline_mode<synchronous>, transform_indices = @transform_7, window_bounds = array<i64: 20, 200>}, {pipeline_mode = #tpu.pipeline_mode<synchronous>, transform_indices = @transform_8, window_bounds = array<i64: 1, 200>}, {transform_indices = @transform_9, window_bounds = array<i64: 16, 200>}]} {
    %c0 = arith.constant 0 : index
    %c0_0 = arith.constant 0 : index
    %0 = vector.load %arg1[%c0, %c0_0] : memref<16x200xf32, #tpu.memory_space<vmem>>, vector<16x200xf32>
    %1 = arith.truncf %0 : vector<16x200xf32> to vector<16x200xbf16>
    %c0_1 = arith.constant 0 : index
    %c0_2 = arith.constant 0 : index
    %2 = vector.load %arg2[%c0_1, %c0_2] : memref<200x20xbf16, #tpu.memory_space<vmem>>, vector<200x20xbf16>
    %cst = arith.constant dense<0.000000e+00> : vector<16x20xf32>
    %3 = tpu.matmul %1, %2, %cst {dimension_numbers = #tpu.dot_dimension_numbers<[1], [0], [0], [1], [0, 0, 1, 1], [], []>} : vector<16x200xbf16>, vector<200x20xbf16>, vector<16x20xf32> -> vector<16x20xf32>
    %c0_3 = arith.constant 0 : index
    %c0_4 = arith.constant 0 : index
    %4 = vector.load %arg3[%c0_3, %c0_4] : memref<1x20xf32, #tpu.memory_space<vmem>>, vector<1x20xf32>
    %5 = vector.broadcast %4 : vector<1x20xf32> to vector<16x20xf32>
    %6 = arith.addf %3, %5 : vector<16x20xf32>
    %7 = arith.negf %6 : vector<16x20xf32>
    %8 = math.exp %7 : vector<16x20xf32>
    %cst_5 = arith.constant 1.000000e+00 : f32
    %9 = vector.broadcast %cst_5 : f32 to vector<16x20xf32>
    %10 = arith.addf %9, %8 : vector<16x20xf32>
    %11 = arith.divf %9, %10 : vector<16x20xf32>
    %12 = arith.truncf %11 : vector<16x20xf32> to vector<16x20xbf16>
    %c0_6 = arith.constant 0 : index
    %c0_7 = arith.constant 0 : index
    %13 = vector.load %arg4[%c0_6, %c0_7] : memref<20x10xbf16, #tpu.memory_space<vmem>>, vector<20x10xbf16>
    %cst_8 = arith.constant dense<0.000000e+00> : vector<16x10xf32>
    %14 = tpu.matmul %12, %13, %cst_8 {dimension_numbers = #tpu.dot_dimension_numbers<[1], [0], [0], [1], [0, 0, 1, 1], [], []>} : vector<16x20xbf16>, vector<20x10xbf16>, vector<16x10xf32> -> vector<16x10xf32>
    %c0_9 = arith.constant 0 : index
    %c0_10 = arith.constant 0 : index
    %15 = vector.load %arg5[%c0_9, %c0_10] : memref<1x10xf32, #tpu.memory_space<vmem>>, vector<1x10xf32>
    %16 = vector.broadcast %15 : vector<1x10xf32> to vector<16x10xf32>
    %17 = arith.addf %14, %16 : vector<16x10xf32>
    %18 = arith.negf %17 : vector<16x10xf32>
    %19 = math.exp %18 : vector<16x10xf32>
    %cst_11 = arith.constant 1.000000e+00 : f32
    %20 = vector.broadcast %cst_11 : f32 to vector<16x10xf32>
    %21 = arith.addf %20, %19 : vector<16x10xf32>
    %22 = arith.divf %20, %21 : vector<16x10xf32>
    %23 = arith.truncf %22 : vector<16x10xf32> to vector<16x10xbf16>
    %c0_12 = arith.constant 0 : index
    %c0_13 = arith.constant 0 : index
    %24 = vector.load %arg6[%c0_12, %c0_13] : memref<10x20xbf16, #tpu.memory_space<vmem>>, vector<10x20xbf16>
    %cst_14 = arith.constant dense<0.000000e+00> : vector<16x20xf32>
    %25 = tpu.matmul %23, %24, %cst_14 {dimension_numbers = #tpu.dot_dimension_numbers<[1], [0], [0], [1], [0, 0, 1, 1], [], []>} : vector<16x10xbf16>, vector<10x20xbf16>, vector<16x20xf32> -> vector<16x20xf32>
    %c0_15 = arith.constant 0 : index
    %c0_16 = arith.constant 0 : index
    %26 = vector.load %arg7[%c0_15, %c0_16] : memref<1x20xf32, #tpu.memory_space<vmem>>, vector<1x20xf32>
    %27 = vector.broadcast %26 : vector<1x20xf32> to vector<16x20xf32>
    %28 = arith.addf %25, %27 : vector<16x20xf32>
    %29 = arith.negf %28 : vector<16x20xf32>
    %30 = math.exp %29 : vector<16x20xf32>
    %cst_17 = arith.constant 1.000000e+00 : f32
    %31 = vector.broadcast %cst_17 : f32 to vector<16x20xf32>
    %32 = arith.addf %31, %30 : vector<16x20xf32>
    %33 = arith.divf %31, %32 : vector<16x20xf32>
    %34 = arith.truncf %33 : vector<16x20xf32> to vector<16x20xbf16>
    %c0_18 = arith.constant 0 : index
    %c0_19 = arith.constant 0 : index
    %35 = vector.load %arg8[%c0_18, %c0_19] : memref<20x200xbf16, #tpu.memory_space<vmem>>, vector<20x200xbf16>
    %cst_20 = arith.constant dense<0.000000e+00> : vector<16x200xf32>
    %36 = tpu.matmul %34, %35, %cst_20 {dimension_numbers = #tpu.dot_dimension_numbers<[1], [0], [0], [1], [0, 0, 1, 1], [], []>} : vector<16x20xbf16>, vector<20x200xbf16>, vector<16x200xf32> -> vector<16x200xf32>
    %c0_21 = arith.constant 0 : index
    %c0_22 = arith.constant 0 : index
    %37 = vector.load %arg9[%c0_21, %c0_22] : memref<1x200xf32, #tpu.memory_space<vmem>>, vector<1x200xf32>
    %38 = vector.broadcast %37 : vector<1x200xf32> to vector<16x200xf32>
    %39 = arith.addf %36, %38 : vector<16x200xf32>
    %40 = arith.truncf %39 : vector<16x200xf32> to vector<16x200xbf16>
    %c0_23 = arith.constant 0 : index
    %c0_24 = arith.constant 0 : index
    %41 = vector.load %arg10[%c0_23, %c0_24] : memref<16x200xbf16, #tpu.memory_space<vmem>>, vector<16x200xbf16>
    tpu.vector_store %arg10[%c0_23, %c0_24], %40 {strides = array<i32>} : memref<16x200xbf16, #tpu.memory_space<vmem>>, vector<16x200xbf16>,
    return
  }
  func.func @transform_0(%arg0: i32) -> (i32, i32) {
    %c0_i32 = arith.constant 0 : i32
    %c0_i32_0 = arith.constant 0 : i32
    return %arg0, %c0_i32 : i32, i32
  }
  func.func @transform_1(%arg0: i32) -> (i32, i32) {
    %c0_i32 = arith.constant 0 : i32
    %c0_i32_0 = arith.constant 0 : i32
    %c0_i32_1 = arith.constant 0 : i32
    return %c0_i32, %c0_i32_0 : i32, i32
  }
  func.func @transform_2(%arg0: i32) -> (i32, i32) {
    %c0_i32 = arith.constant 0 : i32
    %c0_i32_0 = arith.constant 0 : i32
    %c0_i32_1 = arith.constant 0 : i32
    return %c0_i32, %c0_i32_0 : i32, i32
  }
  func.func @transform_3(%arg0: i32) -> (i32, i32) {
    %c0_i32 = arith.constant 0 : i32
    %c0_i32_0 = arith.constant 0 : i32
    %c0_i32_1 = arith.constant 0 : i32
    return %c0_i32, %c0_i32_0 : i32, i32
  }
  func.func @transform_4(%arg0: i32) -> (i32, i32) {
    %c0_i32 = arith.constant 0 : i32
    %c0_i32_0 = arith.constant 0 : i32
    %c0_i32_1 = arith.constant 0 : i32
    return %c0_i32, %c0_i32_0 : i32, i32
  }
  func.func @transform_5(%arg0: i32) -> (i32, i32) {
    %c0_i32 = arith.constant 0 : i32
    %c0_i32_0 = arith.constant 0 : i32
    %c0_i32_1 = arith.constant 0 : i32
    return %c0_i32, %c0_i32_0 : i32, i32
  }
  func.func @transform_6(%arg0: i32) -> (i32, i32) {
    %c0_i32 = arith.constant 0 : i32
    %c0_i32_0 = arith.constant 0 : i32
    %c0_i32_1 = arith.constant 0 : i32
    return %c0_i32, %c0_i32_0 : i32, i32
  }
  func.func @transform_7(%arg0: i32) -> (i32, i32) {
    %c0_i32 = arith.constant 0 : i32
    %c0_i32_0 = arith.constant 0 : i32
    %c0_i32_1 = arith.constant 0 : i32
    return %c0_i32, %c0_i32_0 : i32, i32
  }
  func.func @transform_8(%arg0: i32) -> (i32, i32) {
    %c0_i32 = arith.constant 0 : i32
    %c0_i32_0 = arith.constant 0 : i32
    %c0_i32_1 = arith.constant 0 : i32
    return %c0_i32, %c0_i32_0 : i32, i32
  }
  func.func @transform_9(%arg0: i32) -> (i32, i32) {
    %c0_i32 = arith.constant 0 : i32
    %c0_i32_0 = arith.constant 0 : i32
    return %arg0, %c0_i32 : i32, i32
  }
}

</mosaic_0001>

<llo_original>
// kernel: tpu_custom_call.1
$region0: #{tpu_custom_call.1}
  #allocation0 [shape = 'u32[]', space=smem, size = 0x4, offset = 0x4, fixed_abs, tag = 'smem constant byte address 0x4 - core index']
  #allocation1 [shape = 'u32[144,128]{1,0:T(1,128)}', space=vmem, size = 0x12000, scoped, tag = 'internal scratch']
  %s0 = inlined_call_operand.vmem [shape: f32[10,200], index: 0, kind: input, shape index: {}]
  %s1 = inlined_call_operand.vmem [shape: bf16[200,20], index: 1, kind: input, shape index: {}]
  %s2 = inlined_call_operand.vmem [shape: f32[1,20], index: 2, kind: input, shape index: {}]
  %s3 = inlined_call_operand.vmem [shape: bf16[20,10], index: 3, kind: input, shape index: {}]
  %s4 = inlined_call_operand.vmem [shape: f32[1,10], index: 4, kind: input, shape index: {}]
  %s5 = inlined_call_operand.vmem [shape: bf16[10,20], index: 5, kind: input, shape index: {}]
  %s6 = inlined_call_operand.vmem [shape: f32[1,20], index: 6, kind: input, shape index: {}]
  %s7 = inlined_call_operand.vmem [shape: bf16[20,200], index: 7, kind: input, shape index: {}]
  %s8 = inlined_call_operand.vmem [shape: f32[1,200], index: 8, kind: input, shape index: {}]
  %s9 = inlined_call_operand.hbm [shape: bf16[10,200], index: 9, kind: output, shape index: {}]
  %s10 = sld [smem:[#allocation0]]
  $region46: #{tpu_custom_call.1} parent=0
    _
  %s12 = ssub.s32 1, %s10
  %s13 = scalar_select 0, %s12, %s10
  $region1: #{tpu_custom_call.1} parent=0
    #allocation2 [shape = 'u8[8192]{0}', space=vmem, size = 0x2000, scoped, tag = 'output window, operand 0, single buffered']
    #allocation3 [shape = 's32[1]{0}', space=sflag, size = 0x4, scoped, tag = 'scoped memory for tpu_custom_call.1']
    %14 = vsyncpa [#allocation3], 0
    // Predicated region
    $region2: #{tpu_custom_call.1} parent=1 // pred_check
      _
    $region3: #{tpu_custom_call.1} parent=1 // pred_check_branch
      %16 = sbr.rel (0) target = $region5
    $region4: #{tpu_custom_call.1} parent=1 // pred_region
      _
    $region5: #{tpu_custom_call.1} parent=1 // pred_fallthru
      _
    // Predicated region
    $region6: #{tpu_custom_call.1} parent=1 // pred_check
      _
    $region7: #{tpu_custom_call.1} parent=1 // pred_check_branch
      %18 = sbr.rel (0) target = $region9
    $region8: #{tpu_custom_call.1} parent=1 // pred_region
      _
    $region9: #{tpu_custom_call.1} parent=1 // pred_fallthru
      _
    // Predicated region
    $region10: #{tpu_custom_call.1} parent=1 // pred_check
      _
    $region11: #{tpu_custom_call.1} parent=1 // pred_check_branch
      %20 = sbr.rel (0) target = $region13
    $region12: #{tpu_custom_call.1} parent=1 // pred_region
      _
    $region13: #{tpu_custom_call.1} parent=1 // pred_fallthru
      _
    // Predicated region
    $region14: #{tpu_custom_call.1} parent=1 // pred_check
      _
    $region15: #{tpu_custom_call.1} parent=1 // pred_check_branch
      %22 = sbr.rel (0) target = $region17
    $region16: #{tpu_custom_call.1} parent=1 // pred_region
      _
    $region17: #{tpu_custom_call.1} parent=1 // pred_fallthru
      _
    // Predicated region
    $region18: #{tpu_custom_call.1} parent=1 // pred_check
      _
    $region19: #{tpu_custom_call.1} parent=1 // pred_check_branch
      %24 = sbr.rel (0) target = $region21
    $region20: #{tpu_custom_call.1} parent=1 // pred_region
      _
    $region21: #{tpu_custom_call.1} parent=1 // pred_fallthru
      _
    // Predicated region
    $region22: #{tpu_custom_call.1} parent=1 // pred_check
      _
    $region23: #{tpu_custom_call.1} parent=1 // pred_check_branch
      %26 = sbr.rel (0) target = $region25
    $region24: #{tpu_custom_call.1} parent=1 // pred_region
      _
    $region25: #{tpu_custom_call.1} parent=1 // pred_fallthru
      _
    // Predicated region
    $region26: #{tpu_custom_call.1} parent=1 // pred_check
      _
    $region27: #{tpu_custom_call.1} parent=1 // pred_check_branch
      %28 = sbr.rel (0) target = $region29
    $region28: #{tpu_custom_call.1} parent=1 // pred_region
      _
    $region29: #{tpu_custom_call.1} parent=1 // pred_fallthru
      _
    // Predicated region
    $region30: #{tpu_custom_call.1} parent=1 // pred_check
      _
    $region31: #{tpu_custom_call.1} parent=1 // pred_check_branch
      %30 = sbr.rel (0) target = $region33
    $region32: #{tpu_custom_call.1} parent=1 // pred_region
      _
    $region33: #{tpu_custom_call.1} parent=1 // pred_fallthru
      _
    // Predicated region
    $region34: #{tpu_custom_call.1} parent=1 // pred_check
      _
    $region35: #{tpu_custom_call.1} parent=1 // pred_check_branch
      %32 = sbr.rel (0) target = $region37
    $region36: #{tpu_custom_call.1} parent=1 // pred_region
      _
    $region37: #{tpu_custom_call.1} parent=1 // pred_fallthru
      _
    %v34 = vld [vmem:[%s0] sm:$0xff]
    %v35 = vld [vmem:[%s0 + $0x8] sm:$0xff]
    %v36 = vld [vmem:[%s0 + $0x10] sm:$0xff]
    %v37 = vld [vmem:[%s0 + $0x18] sm:$0xff]
    %v38 = vpack.c.bf16 %v36, %v34
    %v39 = vpack.c.bf16 %v37, %v35
    %v40 = vld [vmem:[%s1] sm:$0xf]
    %v41 = vld [vmem:[%s1 + $0x4] sm:$0xf]
    %v42 = vld [vmem:[%s1 + $0x8] sm:$0xf]
    %v43 = vld [vmem:[%s1 + $0xc] sm:$0xf]
    %v44 = vld [vmem:[%s1 + $0x10] sm:$0xf]
    %v45 = vld [vmem:[%s1 + $0x14] sm:$0xf]
    %v46 = vld [vmem:[%s1 + $0x18] sm:$0xf]
    %v47 = vld [vmem:[%s1 + $0x1c] sm:$0xf]
    %v48 = vld [vmem:[%s1 + $0x20] sm:$0xf]
    %v49 = vld [vmem:[%s1 + $0x24] sm:$0xf]
    %v50 = vld [vmem:[%s1 + $0x28] sm:$0xf]
    %v51 = vld [vmem:[%s1 + $0x2c] sm:$0xf]
    %v52 = vld [vmem:[%s1 + $0x30] sm:$0xf]
    %v53 = vld [vmem:[%s1 + $0x34] sm:$0xf]
    %v54 = vld [vmem:[%s1 + $0x38] sm:$0xf]
    %v55 = vld [vmem:[%s1 + $0x3c] sm:$0xf]
    %v56 = vld [vmem:[%s1 + $0x40] sm:$0xf]
    %v57 = vld [vmem:[%s1 + $0x44] sm:$0xf]
    %v58 = vld [vmem:[%s1 + $0x48] sm:$0xf]
    %v59 = vld [vmem:[%s1 + $0x4c] sm:$0xf]
    %v60 = vld [vmem:[%s1 + $0x50] sm:$0xf]
    %v61 = vld [vmem:[%s1 + $0x54] sm:$0xf]
    %v62 = vld [vmem:[%s1 + $0x58] sm:$0xf]
    %v63 = vld [vmem:[%s1 + $0x5c] sm:$0xf]
    %v64 = vld [vmem:[%s1 + $0x60] sm:$0xf]
    %v65 = vld [vmem:[%s2] sm:$0x1]
    %v67 = vlaneseq
    %v68 = vshrl.u32 %v67, 7
    %v69 = vsub.s32 0, %v68
    %v70 = vrot.slane %v65, %v69
    %v97 = vunpack.c.l.b16 %v40
    %v98 = vunpack.c.l.b16 %v41
    %v99 = vunpack.c.l.b16 %v42
    %v100 = vunpack.c.l.b16 %v43
    %v101 = vunpack.c.l.b16 %v44
    %v102 = vunpack.c.l.b16 %v45
    %v103 = vunpack.c.l.b16 %v46
    %v104 = vunpack.c.l.b16 %v47
    %v105 = vunpack.c.l.b16 %v48
    %v106 = vunpack.c.l.b16 %v49
    %v107 = vunpack.c.l.b16 %v50
    %v108 = vunpack.c.l.b16 %v51
    %v109 = vunpack.c.l.b16 %v52
    %v110 = vunpack.c.l.b16 %v53
    %v111 = vunpack.c.l.b16 %v54
    %v112 = vunpack.c.l.b16 %v55
    %v113 = vunpack.c.l.b16 %v56
    %v114 = vunpack.c.l.b16 %v57
    %v115 = vunpack.c.l.b16 %v58
    %v116 = vunpack.c.l.b16 %v59
    %v117 = vunpack.c.l.b16 %v60
    %v118 = vunpack.c.l.b16 %v61
    %v119 = vunpack.c.l.b16 %v62
    %v120 = vunpack.c.l.b16 %v63
    %v121 = vunpack.c.l.b16 %v64
    %v122 = vpack.c.b16 %v98, %v97
    %v123 = vpack.c.b16 %v100, %v99
    %v124 = vpack.c.b16 %v102, %v101
    %v125 = vpack.c.b16 %v104, %v103
    %v126 = vpack.c.b16 %v106, %v105
    %v127 = vpack.c.b16 %v108, %v107
    %v128 = vpack.c.b16 %v110, %v109
    %v129 = vpack.c.b16 %v112, %v111
    %v130 = vpack.c.b16 %v114, %v113
    %v131 = vpack.c.b16 %v116, %v115
    %v132 = vpack.c.b16 %v118, %v117
    %v133 = vpack.c.b16 %v120, %v119
    %v134 = vpack.c.b16 %v121, %v121
    %vm147 = vcmask 588800
    %v149 = vsel %vm147, %v39, 0
    %vm151 = vcmask 1043456
    %v153 = vsel %vm151, %v134, 0
    %155 = vmatprep.subr.bf16.mxu0 0
    %156 = vmatpush1.bf16.msra.mxu0 %v122
    %157 = vmatprep.subr.bf16.mxu0 0
    %158 = vmatpush1.bf16.msra.mxu0 %v123
    %159 = vmatprep.subr.bf16.mxu0 0
    %160 = vmatpush1.bf16.msra.mxu0 %v124
    %161 = vmatprep.subr.bf16.mxu0 0
    %162 = vmatpush1.bf16.msra.mxu0 %v125
    %163 = vmatprep.subr.bf16.mxu0 0
    %164 = vmatpush1.bf16.msra.mxu0 %v126
    %165 = vmatprep.subr.bf16.mxu0 0
    %166 = vmatpush1.bf16.msra.mxu0 %v127
    %167 = vmatprep.subr.bf16.mxu0 0
    %168 = vmatpush1.bf16.msra.mxu0 %v128
    %169 = vmatprep.subr.bf16.mxu0 0
    %170 = vmatpush1.bf16.msra.mxu0 %v129
    %171 = vmatprep.subr.bf16.mxu0 0
    %172 = vmatpush1.bf16.msra.mxu0 %v130
    %173 = vmatprep.subr.bf16.mxu0 0
    %174 = vmatpush1.bf16.msra.mxu0 %v131
    %175 = vmatprep.subr.bf16.mxu0 0
    %176 = vmatpush1.bf16.msra.mxu0 %v132
    %177 = vmatprep.subr.bf16.mxu0 0
    %178 = vmatpush1.bf16.msra.mxu0 %v133
    %179 = vmatprep.subr.bf16.mxu0 0
    %180 = vmatpush1.bf16.msra.mxu0 %v153
    %181 = vmatprep.subr.bf16.mxu0 0
    %182 = vmatpush1.bf16.msra.mxu0 0
    %183 = vmatprep.subr.bf16.mxu0 0
    %184 = vmatpush1.bf16.msra.mxu0 0
    %185 = vmatprep.subr.bf16.mxu0 0
    %186 = vmatpush1.bf16.msra.mxu0 0
    %187 = vmatprep.mubr.bf16.mxu0 %v149
    %188 = vmatmul.mubr.bf16.gmra.mrb[0].mxu0 %v38
    %v189 = vpop.f32.mrb[0].mxu0
    %v190 = vadd.f32 %v70, %v189
    %v191 = vpop.f32.mrb[0].mxu0
    %v192 = vpop.f32.mrb[0].mxu0
    %v193 = vadd.f32 %v70, %v192
    %v194 = vpop.f32.mrb[0].mxu0
    %195 = vdwg.mxu0
    %v196 = vxor.u32 %v190, 2147483648
    %v197 = vxor.u32 %v193, 2147483648
    %v198 = vmul.f32 %v196, 1.442695
    %v199 = vpow.pop %v198
    %v200 = vmul.f32 %v197, 1.442695
    %v201 = vpow.pop %v200
    %v202 = vadd.f32 %v199, 1.0
    %v203 = vadd.f32 %v201, 1.0
    %v204 = vrcp.pop %v202
    %v205 = vmul.f32 1.0, %v204
    %v206 = vrcp.pop %v203
    %v207 = vmul.f32 1.0, %v206
    %v208 = vpack.c.bf16 %v207, %v205
    %v209 = vld [vmem:[%s3] sm:$0xf]
    %v210 = vld [vmem:[%s3 + $0x4] sm:$0xf]
    %v211 = vld [vmem:[%s3 + $0x8] sm:$0x3]
    %v212 = vld [vmem:[%s4] sm:$0x1]
    %v214 = vlaneseq
    %v215 = vshrl.u32 %v214, 7
    %v216 = vsub.s32 0, %v215
    %v217 = vrot.slane %v212, %v216
    %v222 = vunpack.c.l.b16 %v209
    %v223 = vunpack.c.l.b16 %v210
    %v224 = vunpack.c.l.b16 %v211
    %v225 = vpack.c.b16 %v223, %v222
    %v226 = vpack.c.b16 %v224, %v224
    %vm228 = vcmask 162816
    %v230 = vsel %vm228, %v208, 0
    %vm232 = vcmask 1041408
    %v234 = vsel %vm232, %v226, 0
    %236 = vmatprep.subr.bf16.mxu0 0
    %237 = vmatpush1.bf16.msra.mxu0 %v225
    %238 = vmatprep.subr.bf16.mxu0 0
    %239 = vmatpush1.bf16.msra.mxu0 %v234
    %240 = vmatprep.subr.bf16.mxu0 0
    %241 = vmatpush1.bf16.msra.mxu0 0
    %242 = vmatprep.subr.bf16.mxu0 0
    %243 = vmatpush1.bf16.msra.mxu0 0
    %244 = vmatprep.subr.bf16.mxu0 0
    %245 = vmatpush1.bf16.msra.mxu0 0
    %246 = vmatprep.subr.bf16.mxu0 0
    %247 = vmatpush1.bf16.msra.mxu0 0
    %248 = vmatprep.subr.bf16.mxu0 0
    %249 = vmatpush1.bf16.msra.mxu0 0
    %250 = vmatprep.subr.bf16.mxu0 0
    %251 = vmatpush1.bf16.msra.mxu0 0
    %252 = vmatprep.subr.bf16.mxu0 0
    %253 = vmatpush1.bf16.msra.mxu0 0
    %254 = vmatprep.subr.bf16.mxu0 0
    %255 = vmatpush1.bf16.msra.mxu0 0
    %256 = vmatprep.subr.bf16.mxu0 0
    %257 = vmatpush1.bf16.msra.mxu0 0
    %258 = vmatprep.subr.bf16.mxu0 0
    %259 = vmatpush1.bf16.msra.mxu0 0
    %260 = vmatprep.subr.bf16.mxu0 0
    %261 = vmatpush1.bf16.msra.mxu0 0
    %262 = vmatprep.subr.bf16.mxu0 0
    %263 = vmatpush1.bf16.msra.mxu0 0
    %264 = vmatprep.subr.bf16.mxu0 0
    %265 = vmatpush1.bf16.msra.mxu0 0
    %266 = vmatprep.subr.bf16.mxu0 0
    %267 = vmatpush1.bf16.msra.mxu0 0
    %268 = vmatprep.mubr.bf16.mxu0 0
    %269 = vmatmul.mubr.bf16.gmra.mrb[0].mxu0 %v230
    %v270 = vpop.f32.mrb[0].mxu0
    %v271 = vadd.f32 %v217, %v270
    %v272 = vpop.f32.mrb[0].mxu0
    %v273 = vpop.f32.mrb[0].mxu0
    %v274 = vadd.f32 %v217, %v273
    %v275 = vpop.f32.mrb[0].mxu0
    %276 = vdwg.mxu0
    %v277 = vxor.u32 %v271, 2147483648
    %v278 = vxor.u32 %v274, 2147483648
    %v279 = vmul.f32 %v277, 1.442695
    %v280 = vpow.pop %v279
    %v281 = vmul.f32 %v278, 1.442695
    %v282 = vpow.pop %v281
    %v283 = vadd.f32 %v280, 1.0
    %v284 = vadd.f32 %v282, 1.0
    %v285 = vrcp.pop %v283
    %v286 = vmul.f32 1.0, %v285
    %v287 = vrcp.pop %v284
    %v288 = vmul.f32 1.0, %v287
    %v289 = vpack.c.bf16 %v288, %v286
    %v290 = vld [vmem:[%s5] sm:$0xf]
    %v291 = vld [vmem:[%s5 + $0x4] sm:$0x1]
    %v292 = vld [vmem:[%s6] sm:$0x1]
    %v294 = vlaneseq
    %v295 = vshrl.u32 %v294, 7
    %v296 = vsub.s32 0, %v295
    %v297 = vrot.slane %v292, %v296
    %v301 = vunpack.c.l.b16 %v290
    %v302 = vunpack.c.l.b16 %v291
    %v303 = vpack.c.b16 %v302, %v301
    %vm304 = vcmask 80896
    %v306 = vsel %vm304, %v289, 0
    %vm308 = vcmask 1044480
    %v310 = vsel %vm308, %v303, 0
    %312 = vmatprep.subr.bf16.mxu0 0
    %313 = vmatpush1.bf16.msra.mxu0 %v310
    %314 = vmatprep.subr.bf16.mxu0 0
    %315 = vmatpush1.bf16.msra.mxu0 0
    %316 = vmatprep.subr.bf16.mxu0 0
    %317 = vmatpush1.bf16.msra.mxu0 0
    %318 = vmatprep.subr.bf16.mxu0 0
    %319 = vmatpush1.bf16.msra.mxu0 0
    %320 = vmatprep.subr.bf16.mxu0 0
    %321 = vmatpush1.bf16.msra.mxu0 0
    %322 = vmatprep.subr.bf16.mxu0 0
    %323 = vmatpush1.bf16.msra.mxu0 0
    %324 = vmatprep.subr.bf16.mxu0 0
    %325 = vmatpush1.bf16.msra.mxu0 0
    %326 = vmatprep.subr.bf16.mxu0 0
    %327 = vmatpush1.bf16.msra.mxu0 0
    %328 = vmatprep.subr.bf16.mxu0 0
    %329 = vmatpush1.bf16.msra.mxu0 0
    %330 = vmatprep.subr.bf16.mxu0 0
    %331 = vmatpush1.bf16.msra.mxu0 0
    %332 = vmatprep.subr.bf16.mxu0 0
    %333 = vmatpush1.bf16.msra.mxu0 0
    %334 = vmatprep.subr.bf16.mxu0 0
    %335 = vmatpush1.bf16.msra.mxu0 0
    %336 = vmatprep.subr.bf16.mxu0 0
    %337 = vmatpush1.bf16.msra.mxu0 0
    %338 = vmatprep.subr.bf16.mxu0 0
    %339 = vmatpush1.bf16.msra.mxu0 0
    %340 = vmatprep.subr.bf16.mxu0 0
    %341 = vmatpush1.bf16.msra.mxu0 0
    %342 = vmatprep.subr.bf16.mxu0 0
    %343 = vmatpush1.bf16.msra.mxu0 0
    %344 = vmatprep.mubr.bf16.mxu0 0
    %345 = vmatmul.mubr.bf16.gmra.mrb[0].mxu0 %v306
    %v346 = vpop.f32.mrb[0].mxu0
    %v347 = vadd.f32 %v297, %v346
    %v348 = vpop.f32.mrb[0].mxu0
    %v349 = vpop.f32.mrb[0].mxu0
    %v350 = vadd.f32 %v297, %v349
    %v351 = vpop.f32.mrb[0].mxu0
    %352 = vdwg.mxu0
    %v353 = vxor.u32 %v347, 2147483648
    %v354 = vxor.u32 %v350, 2147483648
    %v355 = vmul.f32 %v353, 1.442695
    %v356 = vpow.pop %v355
    %v357 = vmul.f32 %v354, 1.442695
    %v358 = vpow.pop %v357
    %v359 = vadd.f32 %v356, 1.0
    %v360 = vadd.f32 %v358, 1.0
    %v361 = vrcp.pop %v359
    %v362 = vmul.f32 1.0, %v361
    %v363 = vrcp.pop %v360
    %v364 = vmul.f32 1.0, %v363
    %v365 = vpack.c.bf16 %v364, %v362
    %v366 = vld [vmem:[%s7] sm:$0xff]
    %v367 = vld [vmem:[%s7 + $0x8] sm:$0xff]
    %v368 = vld [vmem:[%s7 + $0x10] sm:$0x33]
    %v369 = vld [vmem:[%s8] sm:$0x3]
    %v371 = vlaneseq
    %v372 = vshrl.u32 %v371, 7
    %v373 = vsub.s32 0, %v372
    %v374 = vrot.slane %v369, %v373
    %v375 = vlaneseq
    %v376 = vshrl.u32 %v375, 7
    %v377 = vsub.s32 1, %v376
    %v378 = vrot.slane %v369, %v377
    %v384 = vunpack.c.l.b16 %v366
    %v385 = vunpack.c.h.b16 %v366
    %v386 = vunpack.c.l.b16 %v367
    %v387 = vunpack.c.h.b16 %v367
    %v388 = vunpack.c.l.b16 %v368
    %v389 = vunpack.c.h.b16 %v368
    %v390 = vpack.c.b16 %v386, %v384
    %v391 = vpack.c.b16 %v387, %v385
    %v392 = vpack.c.b16 %v388, %v388
    %v393 = vpack.c.b16 %v389, %v389
    %v397 = vsel %vm228, %v365, 0
    %v400 = vsel %vm232, %v392, 0
    %v403 = vsel %vm232, %v393, 0
    %405 = vmatprep.subr.bf16.mxu0 %v391
    %406 = vmatpush1.bf16.msra.mxu0 %v390
    %407 = vmatprep.subr.bf16.mxu0 %v403
    %408 = vmatpush1.bf16.msra.mxu0 %v400
    %409 = vmatprep.subr.bf16.mxu0 0
    %410 = vmatpush1.bf16.msra.mxu0 0
    %411 = vmatprep.subr.bf16.mxu0 0
    %412 = vmatpush1.bf16.msra.mxu0 0
    %413 = vmatprep.subr.bf16.mxu0 0
    %414 = vmatpush1.bf16.msra.mxu0 0
    %415 = vmatprep.subr.bf16.mxu0 0
    %416 = vmatpush1.bf16.msra.mxu0 0
    %417 = vmatprep.subr.bf16.mxu0 0
    %418 = vmatpush1.bf16.msra.mxu0 0
    %419 = vmatprep.subr.bf16.mxu0 0
    %420 = vmatpush1.bf16.msra.mxu0 0
    %421 = vmatprep.subr.bf16.mxu0 0
    %422 = vmatpush1.bf16.msra.mxu0 0
    %423 = vmatprep.subr.bf16.mxu0 0
    %424 = vmatpush1.bf16.msra.mxu0 0
    %425 = vmatprep.subr.bf16.mxu0 0
    %426 = vmatpush1.bf16.msra.mxu0 0
    %427 = vmatprep.subr.bf16.mxu0 0
    %428 = vmatpush1.bf16.msra.mxu0 0
    %429 = vmatprep.subr.bf16.mxu0 0
    %430 = vmatpush1.bf16.msra.mxu0 0
    %431 = vmatprep.subr.bf16.mxu0 0
    %432 = vmatpush1.bf16.msra.mxu0 0
    %433 = vmatprep.subr.bf16.mxu0 0
    %434 = vmatpush1.bf16.msra.mxu0 0
    %435 = vmatprep.subr.bf16.mxu0 0
    %436 = vmatpush1.bf16.msra.mxu0 0
    %437 = vmatprep.mubr.bf16.mxu0 0
    %438 = vmatmul.mubr.bf16.gmra.mrb[0].mxu0 %v397
    %v439 = vpop.f32.mrb[0].mxu0
    %v440 = vadd.f32 %v374, %v439
    %v441 = vpop.f32.mrb[0].mxu0
    %v442 = vadd.f32 %v378, %v441
    %v443 = vpop.f32.mrb[0].mxu0
    %v444 = vadd.f32 %v374, %v443
    %v445 = vpop.f32.mrb[0].mxu0
    %v446 = vadd.f32 %v378, %v445
    %447 = vdwg.mxu0
    %v448 = vpack.c.bf16 %v444, %v440
    %v449 = vpack.c.bf16 %v446, %v442
    %v452 = vunpack.c.l.b16 %v448
    %v453 = vunpack.c.l.b16 %v449
    %v454 = vunpack.c.h.b16 %v448
    %v455 = vunpack.c.h.b16 %v449
    %v456 = vpack.c.b16 %v453, %v452
    %v457 = vpack.c.b16 %v455, %v454
    %vm460 = vcmask 588804
    %vm461 = vmor %vm460, %vm151
    %462 = vst.msk [vmem:[#allocation2] sm:$0xff] %vm461, %v456
    %463 = vst.msk [vmem:[#allocation2 + $0x8] sm:$0xff] %vm461, %v457
    // Predicated region
    $region38: #{tpu_custom_call.1} parent=1 // pred_check
      _
    $region39: #{tpu_custom_call.1} parent=1 // pred_check_branch
      %465 = sbr.rel (0) target = $region41
    $region40: #{tpu_custom_call.1} parent=1 // pred_region
      %s467 = ssub.s32 256, 256
      %468 = vsyncadd [#allocation3], %s467
      %s469 = sshll.u32 [#allocation2], 4
      %s470 = int_to_ptr.vmem [resolvable:$true] %s469
      %475 = dma.vmem_to_hbm [thread:$0]  %s470, 256, %s9, [#allocation3], 128, 128, 8
    $region41: #{tpu_custom_call.1} parent=1 // pred_fallthru
      _
    // Predicated region
    $region42: #{tpu_custom_call.1} parent=1 // pred_check
      _
    $region43: #{tpu_custom_call.1} parent=1 // pred_check_branch
      %477 = sbr.rel (0) target = $region45
    $region44: #{tpu_custom_call.1} parent=1 // pred_region
      %478 = dma.done [#allocation3], 256
    $region45: #{tpu_custom_call.1} parent=1 // pred_fallthru
      _
    %479 = vsyncpa [#allocation3], 1

</llo_original>
